<compile_context>
chip_gen: v6e
topology: v6e:2x2x1
jax: 0.10.0
libtpu: 0.0.40
codegen_flags: <defaults>
</compile_context>

<pallas_src>
import jax
import jax.numpy as jnp
import numpy as np
from jax.experimental import pallas as pl
from jax.experimental.pallas import tpu as pltpu  # noqa: F401  (kept for TPU-specific tuning hooks)


# ----------------------------- Pallas kernel --------------------------------


def ising_forward_kernel(h_ref, j_ref, x_ref, mean_ref, sym_ref):
    inv_t = 1.0 / x_ref.shape[-1]         # 1 / T (static)

    h = h_ref[...]                        # (B, N)
    J = j_ref[...]                        # (B, N, N)
    x = x_ref[...]                        # (B, N, T)

    # mean_field = tanh(h + J @ X)   — MXU matmul, VPU bias add, EUP tanh.
    mf = jnp.tanh(h[:, :, None] +
                  jnp.einsum('bij,bjt->bit', J, x,
                             preferred_element_type=jnp.float32))   # (B, N, T)

    # Time mean on the XLU (idle while the MXU runs) — one full-ref store.
    mean_ref[...] = jnp.mean(mf, axis=-1)                            # (B, N)

    # outer = X @ mf^T / T, then symmetrize (16x16 transpose is free XLU work).
    outer = jnp.einsum('bit,bjt->bij', x, mf,
                       preferred_element_type=jnp.float32) * inv_t   # (B, N, N)
    sym_ref[...] = 0.5 * (outer + jnp.swapaxes(outer, -1, -2))       # one full-ref store


# ------------------------------ jitted wrapper -------------------------------


@jax.jit
def ising_forward(h, J, target_ts):
    """h: (B, N), J: (B, N, N), target_ts: (B, N, T) -> (B, N + N*(N-1)/2)."""
    f32 = jnp.float32
    B, N = h.shape

    # Single grid step, whole batch resident in VMEM (default full-array blocks).
    # TODO(synk): if N/T grow, tile the T axis with an "arbitrary" accumulator
    # grid axis + a "parallel" batch axis (v7x: 2 TCs, 64 MiB VMEM) and set
    # vmem_limit_bytes via pltpu.CompilerParams; consider bf16 MXU inputs on
    # v6e/v7x (keep f32 on v5e).
    mf_mean, sym = pl.pallas_call(
        ising_forward_kernel,
        out_shape=(jax.ShapeDtypeStruct((B, N), f32),
                   jax.ShapeDtypeStruct((B, N, N), f32)),
    )(h.astype(f32), J.astype(f32), target_ts.astype(f32))

    # Static triu gather (same ordering as torch.triu_indices, offset=1).
    rows, cols = np.triu_indices(N, k=1)
    triu_idx = jnp.asarray(rows * N + cols, dtype=jnp.int32)
    sym_triu = jnp.take(sym.reshape(B, N * N), triu_idx, axis=1)

    return jnp.concatenate([mf_mean, sym_triu], axis=-1)


# ------------------------- plain-JAX helpers / reference ---------------------


def triu_to_square(triu_pairs, num_nodes, diag_fill):
    rows, cols = jnp.triu_indices(num_nodes, k=1)
    sq = jnp.full((triu_pairs.shape[0], num_nodes, num_nodes), diag_fill,
                  dtype=triu_pairs.dtype)
    sq = sq.at[:, rows, cols].set(triu_pairs)
    sq = sq.at[:, cols, rows].set(triu_pairs)
    return sq


def ising_forward_ref(h, J, target_ts):
    T = target_ts.shape[-1]
    N = h.shape[-1]
    mf = jnp.tanh(h[:, :, None] + jnp.einsum('bij,bjt->bit', J, target_ts))
    mf_mean = jnp.mean(mf, axis=-1)
    outer = jnp.einsum('bit,bjt->bij', target_ts, mf) / T
    sym = outer + jnp.swapaxes(outer, -1, -2)
    rows, cols = jnp.triu_indices(N, k=1)
    return jnp.concatenate([mf_mean, 0.5 * sym[:, rows, cols]], axis=-1)


# ----------------------------------- main ------------------------------------


if __name__ == "__main__":
    num_nodes = 16
    num_time_points = 32
    num_targets = 2
    num_betas_per_target = 2
    B = num_targets * num_betas_per_target
    num_pairs = num_nodes * (num_nodes - 1) // 2

    key = jax.random.PRNGKey(0)
    k1, k2, k3 = jax.random.split(key, 3)

    # Deterministic parameter construction, mirroring IsingModel.__init__
    # with random_init=False (h = target means, J = masked target product means).
    target_state_means = jnp.tanh(
        jax.random.normal(k1, (num_targets, num_nodes), dtype=jnp.float32))
    target_state_product_means_triu = jax.random.uniform(
        k2, (num_targets, num_pairs), minval=-1.0, maxval=1.0, dtype=jnp.float32)

    # replicate over betas and flatten (same ordering as unsqueeze(0).repeat().flatten())
    tsm_rep = jnp.tile(target_state_means, (num_betas_per_target, 1))            # (B, N)
    tspm_square = triu_to_square(target_state_product_means_triu, num_nodes, 1.0)
    tspm_rep = jnp.tile(tspm_square, (num_betas_per_target, 1, 1))               # (B, N, N)

    h = tsm_rep
    diag_mask = 1.0 - jnp.eye(num_nodes, dtype=jnp.float32)
    J = tspm_rep * diag_mask[None]

    # TODO(synk): the Metropolis simulation / fitting methods are stateful RNG
    # training loops and are out of scope for this forward-pass kernel.

    # target_ts: +-1 spin time series, shape (B, N, T)
    target_ts = (2.0 * jax.random.bernoulli(
        k3, 0.5, (B, num_nodes, num_time_points)).astype(jnp.float32) - 1.0)

    out = ising_forward(h, J, target_ts)
    out = jax.block_until_ready(out)

    ref = ising_forward_ref(h, J, target_ts)
    np.testing.assert_allclose(np.asarray(out), np.asarray(ref),
                               rtol=1e-5, atol=1e-5)
    assert out.shape == (B, num_nodes + num_pairs)

    print("KERNEL_OK")
</pallas_src>

<mosaic_0001>
module attributes {stable_mosaic.version = 11 : i64} {
  func.func @ising_forward_kernel(%arg0: memref<4x16xf32, #tpu.memory_space<vmem>>, %arg1: memref<4x16x16xf32, #tpu.memory_space<vmem>>, %arg2: memref<4x16x32xf32, #tpu.memory_space<vmem>>, %arg3: memref<4x16xf32, #tpu.memory_space<vmem>>, %arg4: memref<4x16x16xf32, #tpu.memory_space<vmem>>) attributes {dimension_semantics = [], scalar_prefetch = 0 : i64, scratch_operands = 0 : i64, tpu.core_type = #tpu.core_type<tc>} {
    %c0 = arith.constant 0 : index
    %c0_0 = arith.constant 0 : index
    %0 = vector.load %arg0[%c0, %c0_0] : memref<4x16xf32, #tpu.memory_space<vmem>>, vector<4x16xf32>
    %c0_1 = arith.constant 0 : index
    %c0_2 = arith.constant 0 : index
    %c0_3 = arith.constant 0 : index
    %1 = vector.load %arg1[%c0_1, %c0_2, %c0_3] : memref<4x16x16xf32, #tpu.memory_space<vmem>>, vector<4x16x16xf32>
    %c0_4 = arith.constant 0 : index
    %c0_5 = arith.constant 0 : index
    %c0_6 = arith.constant 0 : index
    %2 = vector.load %arg2[%c0_4, %c0_5, %c0_6] : memref<4x16x32xf32, #tpu.memory_space<vmem>>, vector<4x16x32xf32>
    %3 = vector.shape_cast %0 : vector<4x16xf32> to vector<4x16x1xf32>
    "tpu.trace_start"() <{level = 10 : i32, message = "bij,bjt->bit"}> : () -> ()
    %cst = arith.constant dense<0.000000e+00> : vector<4x16x32xf32>
    %4 = tpu.matmul %1, %2, %cst {dimension_numbers = #tpu.dot_dimension_numbers<[2], [1], [1], [2], [0, 0, 0, 1, 1, 2], [0], [0]>} : vector<4x16x16xf32>, vector<4x16x32xf32>, vector<4x16x32xf32> -> vector<4x16x32xf32>
    "tpu.trace_stop"() : () -> ()
    %5 = vector.broadcast %3 : vector<4x16x1xf32> to vector<4x16x32xf32>
    %6 = arith.addf %5, %4 : vector<4x16x32xf32>
    %7 = math.tanh %6 : vector<4x16x32xf32>
    %cst_7 = arith.constant dense<0.000000e+00> : vector<4x16xf32>
    %8 = vector.multi_reduction <add>, %7, %cst_7 [2] : vector<4x16x32xf32> to vector<4x16xf32>
    %cst_8 = arith.constant 3.200000e+01 : f32
    %9 = vector.broadcast %cst_8 : f32 to vector<4x16xf32>
    %10 = arith.divf %8, %9 : vector<4x16xf32>
    %c0_9 = arith.constant 0 : index
    %c0_10 = arith.constant 0 : index
    %11 = vector.load %arg3[%c0_9, %c0_10] : memref<4x16xf32, #tpu.memory_space<vmem>>, vector<4x16xf32>
    tpu.vector_store %arg3[%c0_9, %c0_10], %10 {strides = array<i32>} : memref<4x16xf32, #tpu.memory_space<vmem>>, vector<4x16xf32>,
    "tpu.trace_start"() <{level = 10 : i32, message = "bit,bjt->bij"}> : () -> ()
    %cst_11 = arith.constant dense<0.000000e+00> : vector<4x16x16xf32>
    %12 = tpu.matmul %2, %7, %cst_11 {dimension_numbers = #tpu.dot_dimension_numbers<[2], [2], [1], [1], [0, 0, 0, 1, 1, 1], [0], [0]>} : vector<4x16x32xf32>, vector<4x16x32xf32>, vector<4x16x16xf32> -> vector<4x16x16xf32>
    "tpu.trace_stop"() : () -> ()
    %cst_12 = arith.constant 3.125000e-02 : f32
    %13 = vector.broadcast %cst_12 : f32 to vector<4x16x16xf32>
    %14 = arith.mulf %12, %13 : vector<4x16x16xf32>
    %15 = tpu.transpose %14, [0, 2, 1] : vector<4x16x16xf32> -> vector<4x16x16xf32>
    %16 = arith.addf %14, %15 : vector<4x16x16xf32>
    %cst_13 = arith.constant 5.000000e-01 : f32
    %17 = vector.broadcast %cst_13 : f32 to vector<4x16x16xf32>
    %18 = arith.mulf %17, %16 : vector<4x16x16xf32>
    %c0_14 = arith.constant 0 : index
    %c0_15 = arith.constant 0 : index
    %c0_16 = arith.constant 0 : index
    %19 = vector.load %arg4[%c0_14, %c0_15, %c0_16] : memref<4x16x16xf32, #tpu.memory_space<vmem>>, vector<4x16x16xf32>
    tpu.vector_store %arg4[%c0_14, %c0_15, %c0_16], %18 {strides = array<i32>} : memref<4x16x16xf32, #tpu.memory_space<vmem>>, vector<4x16x16xf32>,
    return
  }
}

</mosaic_0001>

<llo_original>
// kernel: ising_forward.1
$region0: #{ising_forward.1}
  #allocation0 [shape = 'u32[]', space=smem, size = 0x4, offset = 0x4, fixed_abs, tag = 'smem constant byte address 0x4 - core index']
  #allocation1 [shape = 'u32[144,128]{1,0:T(1,128)}', space=vmem, size = 0x12000, scoped, tag = 'internal scratch']
  %s0 = inlined_call_operand.vmem [shape: f32[4,16], index: 0, kind: input, shape index: {}]
  %s1 = inlined_call_operand.hbm [shape: f32[4,16,16], index: 1, kind: input, shape index: {}]
  %s2 = inlined_call_operand.hbm [shape: f32[4,16,32], index: 2, kind: input, shape index: {}]
  %s3 = inlined_call_operand.vmem [shape: f32[4,16], index: 3, kind: output, shape index: {0}]
  %s4 = inlined_call_operand.vmem [shape: f32[4,16,16], index: 4, kind: output, shape index: {1}]
  %5 = xla_tuple %s3, %s4
  %s6 = sld [smem:[#allocation0]]
  $region38: #{ising_forward.1} parent=0
    _
  %s8 = ssub.s32 1, %s6
  %s9 = scalar_select 0, %s8, %s6
  $region1: #{ising_forward.1} parent=0
    #allocation2 [shape = 'u8[32768]{0}', space=vmem, size = 0x8000, scoped, tag = 'input window, operand 1, single buffered']
    #allocation3 [shape = 's32[1]{0}', space=sflag, size = 0x4, scoped, tag = 'scoped memory for ising_forward.1']
    #allocation4 [shape = 'u8[32768]{0}', space=vmem, size = 0x8000, scoped, tag = 'input window, operand 2, single buffered']
    #allocation5 [shape = 's32[1]{0}', space=sflag, size = 0x4, scoped, tag = 'scoped memory for ising_forward.1']
    %10 = vsyncpa [#allocation3], 0
    %11 = vsyncpa [#allocation5], 0
    // Predicated region
    $region2: #{ising_forward.1} parent=1 // pred_check
      _
    $region3: #{ising_forward.1} parent=1 // pred_check_branch
      %13 = sbr.rel (0) target = $region5
    $region4: #{ising_forward.1} parent=1 // pred_region
      _
    $region5: #{ising_forward.1} parent=1 // pred_fallthru
      _
    // Predicated region
    $region6: #{ising_forward.1} parent=1 // pred_check
      _
    $region7: #{ising_forward.1} parent=1 // pred_check_branch
      %15 = sbr.rel (0) target = $region9
    $region8: #{ising_forward.1} parent=1 // pred_region
      %s17 = ssub.s32 1024, 1024
      %18 = vsyncadd [#allocation3], %s17
      %s19 = sshll.u32 [#allocation2], 4
      %s20 = int_to_ptr.vmem [resolvable:$true] %s19
      %25 = dma.hbm_to_vmem [thread:$0]  %s1, 1024, %s20, [#allocation3], 128, 128, 8
    $region9: #{ising_forward.1} parent=1 // pred_fallthru
      _
    // Predicated region
    $region10: #{ising_forward.1} parent=1 // pred_check
      _
    $region11: #{ising_forward.1} parent=1 // pred_check_branch
      %27 = sbr.rel (0) target = $region13
    $region12: #{ising_forward.1} parent=1 // pred_region
      %s29 = ssub.s32 1024, 1024
      %30 = vsyncadd [#allocation5], %s29
      %s31 = sshll.u32 [#allocation4], 4
      %s32 = int_to_ptr.vmem [resolvable:$true] %s31
      %37 = dma.hbm_to_vmem [thread:$0]  %s2, 1024, %s32, [#allocation5], 128, 128, 8
    $region13: #{ising_forward.1} parent=1 // pred_fallthru
      _
    // Predicated region
    $region14: #{ising_forward.1} parent=1 // pred_check
      _
    $region15: #{ising_forward.1} parent=1 // pred_check_branch
      %39 = sbr.rel (0) target = $region17
    $region16: #{ising_forward.1} parent=1 // pred_region
      %40 = dma.done [#allocation3], 1024
    $region17: #{ising_forward.1} parent=1 // pred_fallthru
      _
    // Predicated region
    $region18: #{ising_forward.1} parent=1 // pred_check
      _
    $region19: #{ising_forward.1} parent=1 // pred_check_branch
      %42 = sbr.rel (0) target = $region21
    $region20: #{ising_forward.1} parent=1 // pred_region
      %43 = dma.done [#allocation5], 1024
    $region21: #{ising_forward.1} parent=1 // pred_fallthru
      _
    %v44 = vld [vmem:[%s0] sm:$0xf]
    %v45 = vld [vmem:[#allocation2] sm:$0xff]
    %v46 = vld [vmem:[#allocation2 + $0x8] sm:$0xff]
    %v47 = vld [vmem:[#allocation2 + $0x10] sm:$0xff]
    %v48 = vld [vmem:[#allocation2 + $0x18] sm:$0xff]
    %v49 = vld [vmem:[#allocation2 + $0x20] sm:$0xff]
    %v50 = vld [vmem:[#allocation2 + $0x28] sm:$0xff]
    %v51 = vld [vmem:[#allocation2 + $0x30] sm:$0xff]
    %v52 = vld [vmem:[#allocation2 + $0x38] sm:$0xff]
    %v53 = vld [vmem:[#allocation4] sm:$0xff]
    %v54 = vld [vmem:[#allocation4 + $0x8] sm:$0xff]
    %v55 = vld [vmem:[#allocation4 + $0x10] sm:$0xff]
    %v56 = vld [vmem:[#allocation4 + $0x18] sm:$0xff]
    %v57 = vld [vmem:[#allocation4 + $0x20] sm:$0xff]
    %v58 = vld [vmem:[#allocation4 + $0x28] sm:$0xff]
    %v59 = vld [vmem:[#allocation4 + $0x30] sm:$0xff]
    %v60 = vld [vmem:[#allocation4 + $0x38] sm:$0xff]
    %v61 = vlaneseq
    %v62 = vshrl.u32 %v61, 7
    %v63 = vsub.s32 0, %v62
    %v64 = vrot.slane %v44, %v63
    %66 = vbcast.lane.b32.xlu0 %v64, 256
    %v67 = vpop.permute.xlu0 %66
    %s69 = sor.u32 256, 8
    %70 = vbcast.lane.b32.xlu0 %v64, %s69
    %v71 = vpop.permute.xlu0 %70
    %v72 = vlaneseq
    %v73 = vshrl.u32 %v72, 7
    %v74 = vsub.s32 1, %v73
    %v75 = vrot.slane %v44, %v74
    %77 = vbcast.lane.b32.xlu0 %v75, 256
    %v78 = vpop.permute.xlu0 %77
    %s80 = sor.u32 256, 8
    %81 = vbcast.lane.b32.xlu0 %v75, %s80
    %v82 = vpop.permute.xlu0 %81
    %v83 = vlaneseq
    %v84 = vshrl.u32 %v83, 7
    %v85 = vsub.s32 2, %v84
    %v86 = vrot.slane %v44, %v85
    %88 = vbcast.lane.b32.xlu0 %v86, 256
    %v89 = vpop.permute.xlu0 %88
    %s91 = sor.u32 256, 8
    %92 = vbcast.lane.b32.xlu0 %v86, %s91
    %v93 = vpop.permute.xlu0 %92
    %v94 = vlaneseq
    %v95 = vshrl.u32 %v94, 7
    %v96 = vsub.s32 3, %v95
    %v97 = vrot.slane %v44, %v96
    %99 = vbcast.lane.b32.xlu0 %v97, 256
    %v100 = vpop.permute.xlu0 %99
    %s102 = sor.u32 256, 8
    %103 = vbcast.lane.b32.xlu0 %v97, %s102
    %v104 = vpop.permute.xlu0 %103
    %vm105 = vcmask 130048
    %v107 = vsel %vm105, %v45, 0
    %v110 = vsel %vm105, %v46, 0
    %112 = vmatprep.subr.mxu0 0.0
    %113 = vmatpush1.msra.mxu0 0.0
    %114 = vmatprep.subr.mxu0 0.0
    %115 = vmatpush1.msra.mxu0 0.0
    %116 = vmatprep.subr.mxu0 0.0
    %117 = vmatpush1.msra.mxu0 0.0
    %118 = vmatprep.subr.mxu0 0.0
    %119 = vmatpush1.msra.mxu0 0.0
    %120 = vmatprep.subr.mxu0 0.0
    %121 = vmatpush1.msra.mxu0 0.0
    %122 = vmatprep.subr.mxu0 0.0
    %123 = vmatpush1.msra.mxu0 0.0
    %124 = vmatprep.subr.mxu0 0.0
    %125 = vmatpush1.msra.mxu0 0.0
    %126 = vmatprep.subr.mxu0 0.0
    %127 = vmatpush1.msra.mxu0 0.0
    %128 = vmatprep.subr.mxu0 0.0
    %129 = vmatpush1.msra.mxu0 0.0
    %130 = vmatprep.subr.mxu0 0.0
    %131 = vmatpush1.msra.mxu0 0.0
    %132 = vmatprep.subr.mxu0 0.0
    %133 = vmatpush1.msra.mxu0 0.0
    %134 = vmatprep.subr.mxu0 0.0
    %135 = vmatpush1.msra.mxu0 0.0
    %136 = vmatprep.subr.mxu0 0.0
    %137 = vmatpush1.msra.mxu0 0.0
    %138 = vmatprep.subr.mxu0 0.0
    %139 = vmatpush1.msra.mxu0 0.0
    %140 = vmatprep.subr.mxu0 0.0
    %141 = vmatpush1.msra.mxu0 %v54
    %142 = vmatprep.subr.mxu0 0.0
    %143 = vmatpush1.msra.mxu0 %v53
    %144 = vmatprep.subr.mxu0 0.0
    %145 = vmatpush2.msra.mxu0 0.0
    %146 = vmatprep.subr.mxu0 0.0
    %147 = vmatpush2.msra.mxu0 0.0
    %148 = vmatprep.subr.mxu0 0.0
    %149 = vmatpush2.msra.mxu0 0.0
    %150 = vmatprep.subr.mxu0 0.0
    %151 = vmatpush2.msra.mxu0 0.0
    %152 = vmatprep.subr.mxu0 0.0
    %153 = vmatpush2.msra.mxu0 0.0
    %154 = vmatprep.subr.mxu0 0.0
    %155 = vmatpush2.msra.mxu0 0.0
    %156 = vmatprep.subr.mxu0 0.0
    %157 = vmatpush2.msra.mxu0 0.0
    %158 = vmatprep.subr.mxu0 0.0
    %159 = vmatpush2.msra.mxu0 0.0
    %160 = vmatprep.subr.mxu0 0.0
    %161 = vmatpush2.msra.mxu0 0.0
    %162 = vmatprep.subr.mxu0 0.0
    %163 = vmatpush2.msra.mxu0 0.0
    %164 = vmatprep.subr.mxu0 0.0
    %165 = vmatpush2.msra.mxu0 0.0
    %166 = vmatprep.subr.mxu0 0.0
    %167 = vmatpush2.msra.mxu0 0.0
    %168 = vmatprep.subr.mxu0 0.0
    %169 = vmatpush2.msra.mxu0 0.0
    %170 = vmatprep.subr.mxu0 0.0
    %171 = vmatpush2.msra.mxu0 0.0
    %172 = vmatprep.subr.mxu0 0.0
    %173 = vmatpush2.msra.mxu0 0.0
    %174 = vmatprep.subr.mxu0 0.0
    %175 = vmatpush2.msra.mxu0 0.0
    %176 = vmatprep.mubr.f32.mxu0 0.0
    %177 = vmatmul.mubr.f32.gmra.mxu0 %v107
    %v178 = vpop.f32.mrf.mxu0
    %v179 = vadd.f32 0.0, %v178
    %v180 = vpop.f32.mrf.mxu0
    %181 = vmatprep.mubr.f32.mxu0 0.0
    %182 = vmatmul.mubr.f32.gmra.mxu0 %v110
    %v183 = vpop.f32.mrf.mxu0
    %v184 = vadd.f32 0.0, %v183
    %v185 = vpop.f32.mrf.mxu0
    %186 = vdwg.mxu0
    %v188 = vsel %vm105, %v47, 0
    %v191 = vsel %vm105, %v48, 0
    %193 = vmatprep.subr.mxu0 0.0
    %194 = vmatpush1.msra.mxu0 0.0
    %195 = vmatprep.subr.mxu0 0.0
    %196 = vmatpush1.msra.mxu0 0.0
    %197 = vmatprep.subr.mxu0 0.0
    %198 = vmatpush1.msra.mxu0 0.0
    %199 = vmatprep.subr.mxu0 0.0
    %200 = vmatpush1.msra.mxu0 0.0
    %201 = vmatprep.subr.mxu0 0.0
    %202 = vmatpush1.msra.mxu0 0.0
    %203 = vmatprep.subr.mxu0 0.0
    %204 = vmatpush1.msra.mxu0 0.0
    %205 = vmatprep.subr.mxu0 0.0
    %206 = vmatpush1.msra.mxu0 0.0
    %207 = vmatprep.subr.mxu0 0.0
    %208 = vmatpush1.msra.mxu0 0.0
    %209 = vmatprep.subr.mxu0 0.0
    %210 = vmatpush1.msra.mxu0 0.0
    %211 = vmatprep.subr.mxu0 0.0
    %212 = vmatpush1.msra.mxu0 0.0
    %213 = vmatprep.subr.mxu0 0.0
    %214 = vmatpush1.msra.mxu0 0.0
    %215 = vmatprep.subr.mxu0 0.0
    %216 = vmatpush1.msra.mxu0 0.0
    %217 = vmatprep.subr.mxu0 0.0
    %218 = vmatpush1.msra.mxu0 0.0
    %219 = vmatprep.subr.mxu0 0.0
    %220 = vmatpush1.msra.mxu0 0.0
    %221 = vmatprep.subr.mxu0 0.0
    %222 = vmatpush1.msra.mxu0 %v56
    %223 = vmatprep.subr.mxu0 0.0
    %224 = vmatpush1.msra.mxu0 %v55
    %225 = vmatprep.subr.mxu0 0.0
    %226 = vmatpush2.msra.mxu0 0.0
    %227 = vmatprep.subr.mxu0 0.0
    %228 = vmatpush2.msra.mxu0 0.0
    %229 = vmatprep.subr.mxu0 0.0
    %230 = vmatpush2.msra.mxu0 0.0
    %231 = vmatprep.subr.mxu0 0.0
    %232 = vmatpush2.msra.mxu0 0.0
    %233 = vmatprep.subr.mxu0 0.0
    %234 = vmatpush2.msra.mxu0 0.0
    %235 = vmatprep.subr.mxu0 0.0
    %236 = vmatpush2.msra.mxu0 0.0
    %237 = vmatprep.subr.mxu0 0.0
    %238 = vmatpush2.msra.mxu0 0.0
    %239 = vmatprep.subr.mxu0 0.0
    %240 = vmatpush2.msra.mxu0 0.0
    %241 = vmatprep.subr.mxu0 0.0
    %242 = vmatpush2.msra.mxu0 0.0
    %243 = vmatprep.subr.mxu0 0.0
    %244 = vmatpush2.msra.mxu0 0.0
    %245 = vmatprep.subr.mxu0 0.0
    %246 = vmatpush2.msra.mxu0 0.0
    %247 = vmatprep.subr.mxu0 0.0
    %248 = vmatpush2.msra.mxu0 0.0
    %249 = vmatprep.subr.mxu0 0.0
    %250 = vmatpush2.msra.mxu0 0.0
    %251 = vmatprep.subr.mxu0 0.0
    %252 = vmatpush2.msra.mxu0 0.0
    %253 = vmatprep.subr.mxu0 0.0
    %254 = vmatpush2.msra.mxu0 0.0
    %255 = vmatprep.subr.mxu0 0.0
    %256 = vmatpush2.msra.mxu0 0.0
    %257 = vmatprep.mubr.f32.mxu0 0.0
    %258 = vmatmul.mubr.f32.gmra.mxu0 %v188
    %v259 = vpop.f32.mrf.mxu0
    %v260 = vadd.f32 0.0, %v259
    %v261 = vpop.f32.mrf.mxu0
    %262 = vmatprep.mubr.f32.mxu0 0.0
    %263 = vmatmul.mubr.f32.gmra.mxu0 %v191
    %v264 = vpop.f32.mrf.mxu0
    %v265 = vadd.f32 0.0, %v264
    %v266 = vpop.f32.mrf.mxu0
    %267 = vdwg.mxu0
    %v269 = vsel %vm105, %v49, 0
    %v272 = vsel %vm105, %v50, 0
    %274 = vmatprep.subr.mxu0 0.0
    %275 = vmatpush1.msra.mxu0 0.0
    %276 = vmatprep.subr.mxu0 0.0
    %277 = vmatpush1.msra.mxu0 0.0
    %278 = vmatprep.subr.mxu0 0.0
    %279 = vmatpush1.msra.mxu0 0.0
    %280 = vmatprep.subr.mxu0 0.0
    %281 = vmatpush1.msra.mxu0 0.0
    %282 = vmatprep.subr.mxu0 0.0
    %283 = vmatpush1.msra.mxu0 0.0
    %284 = vmatprep.subr.mxu0 0.0
    %285 = vmatpush1.msra.mxu0 0.0
    %286 = vmatprep.subr.mxu0 0.0
    %287 = vmatpush1.msra.mxu0 0.0
    %288 = vmatprep.subr.mxu0 0.0
    %289 = vmatpush1.msra.mxu0 0.0
    %290 = vmatprep.subr.mxu0 0.0
    %291 = vmatpush1.msra.mxu0 0.0
    %292 = vmatprep.subr.mxu0 0.0
    %293 = vmatpush1.msra.mxu0 0.0
    %294 = vmatprep.subr.mxu0 0.0
    %295 = vmatpush1.msra.mxu0 0.0
    %296 = vmatprep.subr.mxu0 0.0
    %297 = vmatpush1.msra.mxu0 0.0
    %298 = vmatprep.subr.mxu0 0.0
    %299 = vmatpush1.msra.mxu0 0.0
    %300 = vmatprep.subr.mxu0 0.0
    %301 = vmatpush1.msra.mxu0 0.0
    %302 = vmatprep.subr.mxu0 0.0
    %303 = vmatpush1.msra.mxu0 %v58
    %304 = vmatprep.subr.mxu0 0.0
    %305 = vmatpush1.msra.mxu0 %v57
    %306 = vmatprep.subr.mxu0 0.0
    %307 = vmatpush2.msra.mxu0 0.0
    %308 = vmatprep.subr.mxu0 0.0
    %309 = vmatpush2.msra.mxu0 0.0
    %310 = vmatprep.subr.mxu0 0.0
    %311 = vmatpush2.msra.mxu0 0.0
    %312 = vmatprep.subr.mxu0 0.0
    %313 = vmatpush2.msra.mxu0 0.0
    %314 = vmatprep.subr.mxu0 0.0
    %315 = vmatpush2.msra.mxu0 0.0
    %316 = vmatprep.subr.mxu0 0.0
    %317 = vmatpush2.msra.mxu0 0.0
    %318 = vmatprep.subr.mxu0 0.0
    %319 = vmatpush2.msra.mxu0 0.0
    %320 = vmatprep.subr.mxu0 0.0
    %321 = vmatpush2.msra.mxu0 0.0
    %322 = vmatprep.subr.mxu0 0.0
    %323 = vmatpush2.msra.mxu0 0.0
    %324 = vmatprep.subr.mxu0 0.0
    %325 = vmatpush2.msra.mxu0 0.0
    %326 = vmatprep.subr.mxu0 0.0
    %327 = vmatpush2.msra.mxu0 0.0
    %328 = vmatprep.subr.mxu0 0.0
    %329 = vmatpush2.msra.mxu0 0.0
    %330 = vmatprep.subr.mxu0 0.0
    %331 = vmatpush2.msra.mxu0 0.0
    %332 = vmatprep.subr.mxu0 0.0
    %333 = vmatpush2.msra.mxu0 0.0
    %334 = vmatprep.subr.mxu0 0.0
    %335 = vmatpush2.msra.mxu0 0.0
    %336 = vmatprep.subr.mxu0 0.0
    %337 = vmatpush2.msra.mxu0 0.0
    %338 = vmatprep.mubr.f32.mxu0 0.0
    %339 = vmatmul.mubr.f32.gmra.mxu0 %v269
    %v340 = vpop.f32.mrf.mxu0
    %v341 = vadd.f32 0.0, %v340
    %v342 = vpop.f32.mrf.mxu0
    %343 = vmatprep.mubr.f32.mxu0 0.0
    %344 = vmatmul.mubr.f32.gmra.mxu0 %v272
    %v345 = vpop.f32.mrf.mxu0
    %v346 = vadd.f32 0.0, %v345
    %v347 = vpop.f32.mrf.mxu0
    %348 = vdwg.mxu0
    %v350 = vsel %vm105, %v51, 0
    %v353 = vsel %vm105, %v52, 0
    %355 = vmatprep.subr.mxu0 0.0
    %356 = vmatpush1.msra.mxu0 0.0
    %357 = vmatprep.subr.mxu0 0.0
    %358 = vmatpush1.msra.mxu0 0.0
    %359 = vmatprep.subr.mxu0 0.0
    %360 = vmatpush1.msra.mxu0 0.0
    %361 = vmatprep.subr.mxu0 0.0
    %362 = vmatpush1.msra.mxu0 0.0
    %363 = vmatprep.subr.mxu0 0.0
    %364 = vmatpush1.msra.mxu0 0.0
    %365 = vmatprep.subr.mxu0 0.0
    %366 = vmatpush1.msra.mxu0 0.0
    %367 = vmatprep.subr.mxu0 0.0
    %368 = vmatpush1.msra.mxu0 0.0
    %369 = vmatprep.subr.mxu0 0.0
    %370 = vmatpush1.msra.mxu0 0.0
    %371 = vmatprep.subr.mxu0 0.0
    %372 = vmatpush1.msra.mxu0 0.0
    %373 = vmatprep.subr.mxu0 0.0
    %374 = vmatpush1.msra.mxu0 0.0
    %375 = vmatprep.subr.mxu0 0.0
    %376 = vmatpush1.msra.mxu0 0.0
    %377 = vmatprep.subr.mxu0 0.0
    %378 = vmatpush1.msra.mxu0 0.0
    %379 = vmatprep.subr.mxu0 0.0
    %380 = vmatpush1.msra.mxu0 0.0
    %381 = vmatprep.subr.mxu0 0.0
    %382 = vmatpush1.msra.mxu0 0.0
    %383 = vmatprep.subr.mxu0 0.0
    %384 = vmatpush1.msra.mxu0 %v60
    %385 = vmatprep.subr.mxu0 0.0
    %386 = vmatpush1.msra.mxu0 %v59
    %387 = vmatprep.subr.mxu0 0.0
    %388 = vmatpush2.msra.mxu0 0.0
    %389 = vmatprep.subr.mxu0 0.0
    %390 = vmatpush2.msra.mxu0 0.0
    %391 = vmatprep.subr.mxu0 0.0
    %392 = vmatpush2.msra.mxu0 0.0
    %393 = vmatprep.subr.mxu0 0.0
    %394 = vmatpush2.msra.mxu0 0.0
    %395 = vmatprep.subr.mxu0 0.0
    %396 = vmatpush2.msra.mxu0 0.0
    %397 = vmatprep.subr.mxu0 0.0
    %398 = vmatpush2.msra.mxu0 0.0
    %399 = vmatprep.subr.mxu0 0.0
    %400 = vmatpush2.msra.mxu0 0.0
    %401 = vmatprep.subr.mxu0 0.0
    %402 = vmatpush2.msra.mxu0 0.0
    %403 = vmatprep.subr.mxu0 0.0
    %404 = vmatpush2.msra.mxu0 0.0
    %405 = vmatprep.subr.mxu0 0.0
    %406 = vmatpush2.msra.mxu0 0.0
    %407 = vmatprep.subr.mxu0 0.0
    %408 = vmatpush2.msra.mxu0 0.0
    %409 = vmatprep.subr.mxu0 0.0
    %410 = vmatpush2.msra.mxu0 0.0
    %411 = vmatprep.subr.mxu0 0.0
    %412 = vmatpush2.msra.mxu0 0.0
    %413 = vmatprep.subr.mxu0 0.0
    %414 = vmatpush2.msra.mxu0 0.0
    %415 = vmatprep.subr.mxu0 0.0
    %416 = vmatpush2.msra.mxu0 0.0
    %417 = vmatprep.subr.mxu0 0.0
    %418 = vmatpush2.msra.mxu0 0.0
    %419 = vmatprep.mubr.f32.mxu0 0.0
    %420 = vmatmul.mubr.f32.gmra.mxu0 %v350
    %v421 = vpop.f32.mrf.mxu0
    %v422 = vadd.f32 0.0, %v421
    %v423 = vpop.f32.mrf.mxu0
    %424 = vmatprep.mubr.f32.mxu0 0.0
    %425 = vmatmul.mubr.f32.gmra.mxu0 %v353
    %v426 = vpop.f32.mrf.mxu0
    %v427 = vadd.f32 0.0, %v426
    %v428 = vpop.f32.mrf.mxu0
    %429 = vdwg.mxu0
    %v430 = vadd.f32 %v67, %v179
    %v431 = vadd.f32 %v71, %v184
    %v432 = vadd.f32 %v78, %v260
    %v433 = vadd.f32 %v82, %v265
    %v434 = vadd.f32 %v89, %v341
    %v435 = vadd.f32 %v93, %v346
    %v436 = vadd.f32 %v100, %v422
    %v437 = vadd.f32 %v104, %v427
    %v438 = vtanh.pop %v430
    %v439 = vtanh.pop %v431
    %v440 = vtanh.pop %v432
    %v441 = vtanh.pop %v433
    %v442 = vtanh.pop %v434
    %v443 = vtanh.pop %v435
    %v444 = vtanh.pop %v436
    %v445 = vtanh.pop %v437
    %vm446 = vcmask 261120
    %v447 = vsel %vm446, %v438, 0.0
    %448 = vadd.xlane.f32.xlu0 %v447
    %v449 = vpop.xlane.xlu0 %448
    %v450 = vsel %vm446, %v439, 0.0
    %451 = vadd.xlane.f32.xlu0 %v450
    %v452 = vpop.xlane.xlu0 %451
    %v453 = vsel %vm446, %v440, 0.0
    %454 = vadd.xlane.f32.xlu0 %v453
    %v455 = vpop.xlane.xlu0 %454
    %v456 = vsel %vm446, %v441, 0.0
    %457 = vadd.xlane.f32.xlu0 %v456
    %v458 = vpop.xlane.xlu0 %457
    %v459 = vsel %vm446, %v442, 0.0
    %460 = vadd.xlane.f32.xlu0 %v459
    %v461 = vpop.xlane.xlu0 %460
    %v462 = vsel %vm446, %v443, 0.0
    %463 = vadd.xlane.f32.xlu0 %v462
    %v464 = vpop.xlane.xlu0 %463
    %v465 = vsel %vm446, %v444, 0.0
    %466 = vadd.xlane.f32.xlu0 %v465
    %v467 = vpop.xlane.xlu0 %466
    %v468 = vsel %vm446, %v445, 0.0
    %469 = vadd.xlane.f32.xlu0 %v468
    %v470 = vpop.xlane.xlu0 %469
    %v471 = vrcp.pop 32.0
    %v472 = vmul.f32 %v449, %v471
    %v473 = vmul.f32 %v452, %v471
    %v474 = vmul.f32 %v455, %v471
    %v475 = vmul.f32 %v458, %v471
    %v476 = vmul.f32 %v461, %v471
    %v477 = vmul.f32 %v464, %v471
    %v478 = vmul.f32 %v467, %v471
    %v479 = vmul.f32 %v470, %v471
    %v488 = vlaneseq
    %v489 = vand.u32 %v488, 127
    %v490 = vlaneseq
    %v491 = vshrl.u32 %v490, 7
    %v492 = vsub.s32 %v489, %v491
    %v493 = vrot.slane %v472, %v492
    %v494 = vadd.s32 %v489, 4294967288
    %v495 = vlaneseq
    %v496 = vshrl.u32 %v495, 7
    %v497 = vsub.s32 %v494, %v496
    %v498 = vrot.slane %v473, %v497
    %vm499 = vcmask 130112
    %v500 = vsel %vm499, %v498, %v493
    %v501 = vlaneseq
    %v502 = vshrl.u32 %v501, 7
    %v503 = vsub.s32 %v489, %v502
    %v504 = vrot.slane %v474, %v503
    %v505 = vlaneseq
    %v506 = vshrl.u32 %v505, 7
    %v507 = vsub.s32 %v494, %v506
    %v508 = vrot.slane %v475, %v507
    %v509 = vsel %vm499, %v508, %v504
    %v510 = vlaneseq
    %v511 = vshrl.u32 %v510, 7
    %v512 = vsub.s32 %v489, %v511
    %v513 = vrot.slane %v476, %v512
    %v514 = vlaneseq
    %v515 = vshrl.u32 %v514, 7
    %v516 = vsub.s32 %v494, %v515
    %v517 = vrot.slane %v477, %v516
    %v518 = vsel %vm499, %v517, %v513
    %v519 = vlaneseq
    %v520 = vshrl.u32 %v519, 7
    %v521 = vsub.s32 %v489, %v520
    %v522 = vrot.slane %v478, %v521
    %v523 = vlaneseq
    %v524 = vshrl.u32 %v523, 7
    %v525 = vsub.s32 %v494, %v524
    %v526 = vrot.slane %v479, %v525
    %v527 = vsel %vm499, %v526, %v522
    %vm528 = vcmask 1041409
    %v529 = vsel %vm528, %v509, %v500
    %vm530 = vcmask 1042434
    %v531 = vsel %vm530, %v518, %v529
    %vm532 = vcmask 1043459
    %v533 = vsel %vm532, %v527, %v531
    %vm535 = vcmask 125952
    %536 = vst.msk [vmem:[%s3] sm:$0xf] %vm535, %v533
    %v538 = vsel %vm446, %v53, 0
    %v541 = vsel %vm446, %v54, 0
    %v544 = vsel %vm446, %v438, 0
    %v547 = vsel %vm446, %v439, 0
    %549 = vmatprep.subr.mxu0 0.0
    %550 = vmatpush1.xpose.msra.mxu0 0.0
    %551 = vmatprep.subr.mxu0 0.0
    %552 = vmatpush1.xpose.msra.mxu0 0.0
    %553 = vmatprep.subr.mxu0 0.0
    %554 = vmatpush1.xpose.msra.mxu0 0.0
    %555 = vmatprep.subr.mxu0 0.0
    %556 = vmatpush1.xpose.msra.mxu0 0.0
    %557 = vmatprep.subr.mxu0 0.0
    %558 = vmatpush1.xpose.msra.mxu0 0.0
    %559 = vmatprep.subr.mxu0 0.0
    %560 = vmatpush1.xpose.msra.mxu0 0.0
    %561 = vmatprep.subr.mxu0 0.0
    %562 = vmatpush1.xpose.msra.mxu0 0.0
    %563 = vmatprep.subr.mxu0 0.0
    %564 = vmatpush1.xpose.msra.mxu0 0.0
    %565 = vmatprep.subr.mxu0 0.0
    %566 = vmatpush1.xpose.msra.mxu0 0.0
    %567 = vmatprep.subr.mxu0 0.0
    %568 = vmatpush1.xpose.msra.mxu0 0.0
    %569 = vmatprep.subr.mxu0 0.0
    %570 = vmatpush1.xpose.msra.mxu0 0.0
    %571 = vmatprep.subr.mxu0 0.0
    %572 = vmatpush1.xpose.msra.mxu0 0.0
    %573 = vmatprep.subr.mxu0 0.0
    %574 = vmatpush1.xpose.msra.mxu0 0.0
    %575 = vmatprep.subr.mxu0 0.0
    %576 = vmatpush1.xpose.msra.mxu0 0.0
    %577 = vmatprep.subr.mxu0 0.0
    %578 = vmatpush1.xpose.msra.mxu0 %v547
    %579 = vmatprep.subr.mxu0 0.0
    %580 = vmatpush1.xpose.msra.mxu0 %v544
    %581 = vmatprep.subr.mxu0 0.0
    %582 = vmatpush2.xpose.msra.mxu0 0.0
    %583 = vmatprep.subr.mxu0 0.0
    %584 = vmatpush2.xpose.msra.mxu0 0.0
    %585 = vmatprep.subr.mxu0 0.0
    %586 = vmatpush2.xpose.msra.mxu0 0.0
    %587 = vmatprep.subr.mxu0 0.0
    %588 = vmatpush2.xpose.msra.mxu0 0.0
    %589 = vmatprep.subr.mxu0 0.0
    %590 = vmatpush2.xpose.msra.mxu0 0.0
    %591 = vmatprep.subr.mxu0 0.0
    %592 = vmatpush2.xpose.msra.mxu0 0.0
    %593 = vmatprep.subr.mxu0 0.0
    %594 = vmatpush2.xpose.msra.mxu0 0.0
    %595 = vmatprep.subr.mxu0 0.0
    %596 = vmatpush2.xpose.msra.mxu0 0.0
    %597 = vmatprep.subr.mxu0 0.0
    %598 = vmatpush2.xpose.msra.mxu0 0.0
    %599 = vmatprep.subr.mxu0 0.0
    %600 = vmatpush2.xpose.msra.mxu0 0.0
    %601 = vmatprep.subr.mxu0 0.0
    %602 = vmatpush2.xpose.msra.mxu0 0.0
    %603 = vmatprep.subr.mxu0 0.0
    %604 = vmatpush2.xpose.msra.mxu0 0.0
    %605 = vmatprep.subr.mxu0 0.0
    %606 = vmatpush2.xpose.msra.mxu0 0.0
    %607 = vmatprep.subr.mxu0 0.0
    %608 = vmatpush2.xpose.msra.mxu0 0.0
    %609 = vmatprep.subr.mxu0 0.0
    %610 = vmatpush2.xpose.msra.mxu0 0.0
    %611 = vmatprep.subr.mxu0 0.0
    %612 = vmatpush2.xpose.msra.mxu0 0.0
    %613 = vmatprep.mubr.f32.mxu0 0.0
    %614 = vmatmul.mubr.f32.gmra.mxu0 %v538
    %v615 = vpop.f32.mrf.mxu0
    %v616 = vadd.f32 0.0, %v615
    %v617 = vpop.f32.mrf.mxu0
    %618 = vmatprep.mubr.f32.mxu0 0.0
    %619 = vmatmul.mubr.f32.gmra.mxu0 %v541
    %v620 = vpop.f32.mrf.mxu0
    %v621 = vadd.f32 0.0, %v620
    %v622 = vpop.f32.mrf.mxu0
    %623 = vdwg.mxu0
    %v625 = vsel %vm446, %v55, 0
    %v628 = vsel %vm446, %v56, 0
    %v631 = vsel %vm446, %v440, 0
    %v634 = vsel %vm446, %v441, 0
    %636 = vmatprep.subr.mxu0 0.0
    %637 = vmatpush1.xpose.msra.mxu0 0.0
    %638 = vmatprep.subr.mxu0 0.0
    %639 = vmatpush1.xpose.msra.mxu0 0.0
    %640 = vmatprep.subr.mxu0 0.0
    %641 = vmatpush1.xpose.msra.mxu0 0.0
    %642 = vmatprep.subr.mxu0 0.0
    %643 = vmatpush1.xpose.msra.mxu0 0.0
    %644 = vmatprep.subr.mxu0 0.0
    %645 = vmatpush1.xpose.msra.mxu0 0.0
    %646 = vmatprep.subr.mxu0 0.0
    %647 = vmatpush1.xpose.msra.mxu0 0.0
    %648 = vmatprep.subr.mxu0 0.0
    %649 = vmatpush1.xpose.msra.mxu0 0.0
    %650 = vmatprep.subr.mxu0 0.0
    %651 = vmatpush1.xpose.msra.mxu0 0.0
    %652 = vmatprep.subr.mxu0 0.0
    %653 = vmatpush1.xpose.msra.mxu0 0.0
    %654 = vmatprep.subr.mxu0 0.0
    %655 = vmatpush1.xpose.msra.mxu0 0.0
    %656 = vmatprep.subr.mxu0 0.0
    %657 = vmatpush1.xpose.msra.mxu0 0.0
    %658 = vmatprep.subr.mxu0 0.0
    %659 = vmatpush1.xpose.msra.mxu0 0.0
    %660 = vmatprep.subr.mxu0 0.0
    %661 = vmatpush1.xpose.msra.mxu0 0.0
    %662 = vmatprep.subr.mxu0 0.0
    %663 = vmatpush1.xpose.msra.mxu0 0.0
    %664 = vmatprep.subr.mxu0 0.0
    %665 = vmatpush1.xpose.msra.mxu0 %v634
    %666 = vmatprep.subr.mxu0 0.0
    %667 = vmatpush1.xpose.msra.mxu0 %v631
    %668 = vmatprep.subr.mxu0 0.0
    %669 = vmatpush2.xpose.msra.mxu0 0.0
    %670 = vmatprep.subr.mxu0 0.0
    %671 = vmatpush2.xpose.msra.mxu0 0.0
    %672 = vmatprep.subr.mxu0 0.0
    %673 = vmatpush2.xpose.msra.mxu0 0.0
    %674 = vmatprep.subr.mxu0 0.0
    %675 = vmatpush2.xpose.msra.mxu0 0.0
    %676 = vmatprep.subr.mxu0 0.0
    %677 = vmatpush2.xpose.msra.mxu0 0.0
    %678 = vmatprep.subr.mxu0 0.0
    %679 = vmatpush2.xpose.msra.mxu0 0.0
    %680 = vmatprep.subr.mxu0 0.0
    %681 = vmatpush2.xpose.msra.mxu0 0.0
    %682 = vmatprep.subr.mxu0 0.0
    %683 = vmatpush2.xpose.msra.mxu0 0.0
    %684 = vmatprep.subr.mxu0 0.0
    %685 = vmatpush2.xpose.msra.mxu0 0.0
    %686 = vmatprep.subr.mxu0 0.0
    %687 = vmatpush2.xpose.msra.mxu0 0.0
    %688 = vmatprep.subr.mxu0 0.0
    %689 = vmatpush2.xpose.msra.mxu0 0.0
    %690 = vmatprep.subr.mxu0 0.0
    %691 = vmatpush2.xpose.msra.mxu0 0.0
    %692 = vmatprep.subr.mxu0 0.0
    %693 = vmatpush2.xpose.msra.mxu0 0.0
    %694 = vmatprep.subr.mxu0 0.0
    %695 = vmatpush2.xpose.msra.mxu0 0.0
    %696 = vmatprep.subr.mxu0 0.0
    %697 = vmatpush2.xpose.msra.mxu0 0.0
    %698 = vmatprep.subr.mxu0 0.0
    %699 = vmatpush2.xpose.msra.mxu0 0.0
    %700 = vmatprep.mubr.f32.mxu0 0.0
    %701 = vmatmul.mubr.f32.gmra.mxu0 %v625
    %v702 = vpop.f32.mrf.mxu0
    %v703 = vadd.f32 0.0, %v702
    %v704 = vpop.f32.mrf.mxu0
    %705 = vmatprep.mubr.f32.mxu0 0.0
    %706 = vmatmul.mubr.f32.gmra.mxu0 %v628
    %v707 = vpop.f32.mrf.mxu0
    %v708 = vadd.f32 0.0, %v707
    %v709 = vpop.f32.mrf.mxu0
    %710 = vdwg.mxu0
    %v712 = vsel %vm446, %v57, 0
    %v715 = vsel %vm446, %v58, 0
    %v718 = vsel %vm446, %v442, 0
    %v721 = vsel %vm446, %v443, 0
    %723 = vmatprep.subr.mxu0 0.0
    %724 = vmatpush1.xpose.msra.mxu0 0.0
    %725 = vmatprep.subr.mxu0 0.0
    %726 = vmatpush1.xpose.msra.mxu0 0.0
    %727 = vmatprep.subr.mxu0 0.0
    %728 = vmatpush1.xpose.msra.mxu0 0.0
    %729 = vmatprep.subr.mxu0 0.0
    %730 = vmatpush1.xpose.msra.mxu0 0.0
    %731 = vmatprep.subr.mxu0 0.0
    %732 = vmatpush1.xpose.msra.mxu0 0.0
    %733 = vmatprep.subr.mxu0 0.0
    %734 = vmatpush1.xpose.msra.mxu0 0.0
    %735 = vmatprep.subr.mxu0 0.0
    %736 = vmatpush1.xpose.msra.mxu0 0.0
    %737 = vmatprep.subr.mxu0 0.0
    %738 = vmatpush1.xpose.msra.mxu0 0.0
    %739 = vmatprep.subr.mxu0 0.0
    %740 = vmatpush1.xpose.msra.mxu0 0.0
    %741 = vmatprep.subr.mxu0 0.0
    %742 = vmatpush1.xpose.msra.mxu0 0.0
    %743 = vmatprep.subr.mxu0 0.0
    %744 = vmatpush1.xpose.msra.mxu0 0.0
    %745 = vmatprep.subr.mxu0 0.0
    %746 = vmatpush1.xpose.msra.mxu0 0.0
    %747 = vmatprep.subr.mxu0 0.0
    %748 = vmatpush1.xpose.msra.mxu0 0.0
    %749 = vmatprep.subr.mxu0 0.0
    %750 = vmatpush1.xpose.msra.mxu0 0.0
    %751 = vmatprep.subr.mxu0 0.0
    %752 = vmatpush1.xpose.msra.mxu0 %v721
    %753 = vmatprep.subr.mxu0 0.0
    %754 = vmatpush1.xpose.msra.mxu0 %v718
    %755 = vmatprep.subr.mxu0 0.0
    %756 = vmatpush2.xpose.msra.mxu0 0.0
    %757 = vmatprep.subr.mxu0 0.0
    %758 = vmatpush2.xpose.msra.mxu0 0.0
    %759 = vmatprep.subr.mxu0 0.0
    %760 = vmatpush2.xpose.msra.mxu0 0.0
    %761 = vmatprep.subr.mxu0 0.0
    %762 = vmatpush2.xpose.msra.mxu0 0.0
    %763 = vmatprep.subr.mxu0 0.0
    %764 = vmatpush2.xpose.msra.mxu0 0.0
    %765 = vmatprep.subr.mxu0 0.0
    %766 = vmatpush2.xpose.msra.mxu0 0.0
    %767 = vmatprep.subr.mxu0 0.0
    %768 = vmatpush2.xpose.msra.mxu0 0.0
    %769 = vmatprep.subr.mxu0 0.0
    %770 = vmatpush2.xpose.msra.mxu0 0.0
    %771 = vmatprep.subr.mxu0 0.0
    %772 = vmatpush2.xpose.msra.mxu0 0.0
    %773 = vmatprep.subr.mxu0 0.0
    %774 = vmatpush2.xpose.msra.mxu0 0.0
    %775 = vmatprep.subr.mxu0 0.0
    %776 = vmatpush2.xpose.msra.mxu0 0.0
    %777 = vmatprep.subr.mxu0 0.0
    %778 = vmatpush2.xpose.msra.mxu0 0.0
    %779 = vmatprep.subr.mxu0 0.0
    %780 = vmatpush2.xpose.msra.mxu0 0.0
    %781 = vmatprep.subr.mxu0 0.0
    %782 = vmatpush2.xpose.msra.mxu0 0.0
    %783 = vmatprep.subr.mxu0 0.0
    %784 = vmatpush2.xpose.msra.mxu0 0.0
    %785 = vmatprep.subr.mxu0 0.0
    %786 = vmatpush2.xpose.msra.mxu0 0.0
    %787 = vmatprep.mubr.f32.mxu0 0.0
    %788 = vmatmul.mubr.f32.gmra.mxu0 %v712
    %v789 = vpop.f32.mrf.mxu0
    %v790 = vadd.f32 0.0, %v789
    %v791 = vpop.f32.mrf.mxu0
    %792 = vmatprep.mubr.f32.mxu0 0.0
    %793 = vmatmul.mubr.f32.gmra.mxu0 %v715
    %v794 = vpop.f32.mrf.mxu0
    %v795 = vadd.f32 0.0, %v794
    %v796 = vpop.f32.mrf.mxu0
    %797 = vdwg.mxu0
    %v799 = vsel %vm446, %v59, 0
    %v802 = vsel %vm446, %v60, 0
    %v805 = vsel %vm446, %v444, 0
    %v808 = vsel %vm446, %v445, 0
    %810 = vmatprep.subr.mxu0 0.0
    %811 = vmatpush1.xpose.msra.mxu0 0.0
    %812 = vmatprep.subr.mxu0 0.0
    %813 = vmatpush1.xpose.msra.mxu0 0.0
    %814 = vmatprep.subr.mxu0 0.0
    %815 = vmatpush1.xpose.msra.mxu0 0.0
    %816 = vmatprep.subr.mxu0 0.0
    %817 = vmatpush1.xpose.msra.mxu0 0.0
    %818 = vmatprep.subr.mxu0 0.0
    %819 = vmatpush1.xpose.msra.mxu0 0.0
    %820 = vmatprep.subr.mxu0 0.0
    %821 = vmatpush1.xpose.msra.mxu0 0.0
    %822 = vmatprep.subr.mxu0 0.0
    %823 = vmatpush1.xpose.msra.mxu0 0.0
    %824 = vmatprep.subr.mxu0 0.0
    %825 = vmatpush1.xpose.msra.mxu0 0.0
    %826 = vmatprep.subr.mxu0 0.0
    %827 = vmatpush1.xpose.msra.mxu0 0.0
    %828 = vmatprep.subr.mxu0 0.0
    %829 = vmatpush1.xpose.msra.mxu0 0.0
    %830 = vmatprep.subr.mxu0 0.0
    %831 = vmatpush1.xpose.msra.mxu0 0.0
    %832 = vmatprep.subr.mxu0 0.0
    %833 = vmatpush1.xpose.msra.mxu0 0.0
    %834 = vmatprep.subr.mxu0 0.0
    %835 = vmatpush1.xpose.msra.mxu0 0.0
    %836 = vmatprep.subr.mxu0 0.0
    %837 = vmatpush1.xpose.msra.mxu0 0.0
    %838 = vmatprep.subr.mxu0 0.0
    %839 = vmatpush1.xpose.msra.mxu0 %v808
    %840 = vmatprep.subr.mxu0 0.0
    %841 = vmatpush1.xpose.msra.mxu0 %v805
    %842 = vmatprep.subr.mxu0 0.0
    %843 = vmatpush2.xpose.msra.mxu0 0.0
    %844 = vmatprep.subr.mxu0 0.0
    %845 = vmatpush2.xpose.msra.mxu0 0.0
    %846 = vmatprep.subr.mxu0 0.0
    %847 = vmatpush2.xpose.msra.mxu0 0.0
    %848 = vmatprep.subr.mxu0 0.0
    %849 = vmatpush2.xpose.msra.mxu0 0.0
    %850 = vmatprep.subr.mxu0 0.0
    %851 = vmatpush2.xpose.msra.mxu0 0.0
    %852 = vmatprep.subr.mxu0 0.0
    %853 = vmatpush2.xpose.msra.mxu0 0.0
    %854 = vmatprep.subr.mxu0 0.0
    %855 = vmatpush2.xpose.msra.mxu0 0.0
    %856 = vmatprep.subr.mxu0 0.0
    %857 = vmatpush2.xpose.msra.mxu0 0.0
    %858 = vmatprep.subr.mxu0 0.0
    %859 = vmatpush2.xpose.msra.mxu0 0.0
    %860 = vmatprep.subr.mxu0 0.0
    %861 = vmatpush2.xpose.msra.mxu0 0.0
    %862 = vmatprep.subr.mxu0 0.0
    %863 = vmatpush2.xpose.msra.mxu0 0.0
    %864 = vmatprep.subr.mxu0 0.0
    %865 = vmatpush2.xpose.msra.mxu0 0.0
    %866 = vmatprep.subr.mxu0 0.0
    %867 = vmatpush2.xpose.msra.mxu0 0.0
    %868 = vmatprep.subr.mxu0 0.0
    %869 = vmatpush2.xpose.msra.mxu0 0.0
    %870 = vmatprep.subr.mxu0 0.0
    %871 = vmatpush2.xpose.msra.mxu0 0.0
    %872 = vmatprep.subr.mxu0 0.0
    %873 = vmatpush2.xpose.msra.mxu0 0.0
    %874 = vmatprep.mubr.f32.mxu0 0.0
    %875 = vmatmul.mubr.f32.gmra.mxu0 %v799
    %v876 = vpop.f32.mrf.mxu0
    %v877 = vadd.f32 0.0, %v876
    %v878 = vpop.f32.mrf.mxu0
    %879 = vmatprep.mubr.f32.mxu0 0.0
    %880 = vmatmul.mubr.f32.gmra.mxu0 %v802
    %v881 = vpop.f32.mrf.mxu0
    %v882 = vadd.f32 0.0, %v881
    %v883 = vpop.f32.mrf.mxu0
    %884 = vdwg.mxu0
    %v885 = vmul.f32 %v616, 0.03125
    %v886 = vmul.f32 %v621, 0.03125
    %v887 = vmul.f32 %v703, 0.03125
    %v888 = vmul.f32 %v708, 0.03125
    %v889 = vmul.f32 %v790, 0.03125
    %v890 = vmul.f32 %v795, 0.03125
    %v891 = vmul.f32 %v877, 0.03125
    %v892 = vmul.f32 %v882, 0.03125
    %893 = vxpose.xlu0.b32.start [1/16] %v885, 128
    %894 = vxpose.xlu0.b32.cont [2/16] %v886, 128
    %895 = vxpose.xlu0.b32.cont [3/16] 0.0, 128
    %896 = vxpose.xlu0.b32.cont [4/16] 0.0, 128
    %897 = vxpose.xlu0.b32.cont [5/16] 0.0, 128
    %898 = vxpose.xlu0.b32.cont [6/16] 0.0, 128
    %899 = vxpose.xlu0.b32.cont [7/16] 0.0, 128
    %900 = vxpose.xlu0.b32.cont [8/16] 0.0, 128
    %901 = vxpose.xlu0.b32.cont [9/16] 0.0, 128
    %902 = vxpose.xlu0.b32.cont [10/16] 0.0, 128
    %903 = vxpose.xlu0.b32.cont [11/16] 0.0, 128
    %904 = vxpose.xlu0.b32.cont [12/16] 0.0, 128
    %905 = vxpose.xlu0.b32.cont [13/16] 0.0, 128
    %906 = vxpose.xlu0.b32.cont [14/16] 0.0, 128
    %907 = vxpose.xlu0.b32.cont [15/16] 0.0, 128
    %908 = vxpose.xlu0.b32.end [16/16] 0.0, 128
    %v909 = vpop.trf.xlu0
    %v910 = vpop.trf.xlu0
    %v911 = vpop.trf.xlu0
    %v912 = vpop.trf.xlu0
    %v913 = vpop.trf.xlu0
    %v914 = vpop.trf.xlu0
    %v915 = vpop.trf.xlu0
    %v916 = vpop.trf.xlu0
    %v917 = vpop.trf.xlu0
    %v918 = vpop.trf.xlu0
    %v919 = vpop.trf.xlu0
    %v920 = vpop.trf.xlu0
    %v921 = vpop.trf.xlu0
    %v922 = vpop.trf.xlu0
    %v923 = vpop.trf.xlu0
    %v924 = vpop.trf.xlu0
    %925 = vxpose.xlu0.b32.start [1/16] %v887, 128
    %926 = vxpose.xlu0.b32.cont [2/16] %v888, 128
    %927 = vxpose.xlu0.b32.cont [3/16] 0.0, 128
    %928 = vxpose.xlu0.b32.cont [4/16] 0.0, 128
    %929 = vxpose.xlu0.b32.cont [5/16] 0.0, 128
    %930 = vxpose.xlu0.b32.cont [6/16] 0.0, 128
    %931 = vxpose.xlu0.b32.cont [7/16] 0.0, 128
    %932 = vxpose.xlu0.b32.cont [8/16] 0.0, 128
    %933 = vxpose.xlu0.b32.cont [9/16] 0.0, 128
    %934 = vxpose.xlu0.b32.cont [10/16] 0.0, 128
    %935 = vxpose.xlu0.b32.cont [11/16] 0.0, 128
    %936 = vxpose.xlu0.b32.cont [12/16] 0.0, 128
    %937 = vxpose.xlu0.b32.cont [13/16] 0.0, 128
    %938 = vxpose.xlu0.b32.cont [14/16] 0.0, 128
    %939 = vxpose.xlu0.b32.cont [15/16] 0.0, 128
    %940 = vxpose.xlu0.b32.end [16/16] 0.0, 128
    %v941 = vpop.trf.xlu0
    %v942 = vpop.trf.xlu0
    %v943 = vpop.trf.xlu0
    %v944 = vpop.trf.xlu0
    %v945 = vpop.trf.xlu0
    %v946 = vpop.trf.xlu0
    %v947 = vpop.trf.xlu0
    %v948 = vpop.trf.xlu0
    %v949 = vpop.trf.xlu0
    %v950 = vpop.trf.xlu0
    %v951 = vpop.trf.xlu0
    %v952 = vpop.trf.xlu0
    %v953 = vpop.trf.xlu0
    %v954 = vpop.trf.xlu0
    %v955 = vpop.trf.xlu0
    %v956 = vpop.trf.xlu0
    %957 = vxpose.xlu0.b32.start [1/16] %v889, 128
    %958 = vxpose.xlu0.b32.cont [2/16] %v890, 128
    %959 = vxpose.xlu0.b32.cont [3/16] 0.0, 128
    %960 = vxpose.xlu0.b32.cont [4/16] 0.0, 128
    %961 = vxpose.xlu0.b32.cont [5/16] 0.0, 128
    %962 = vxpose.xlu0.b32.cont [6/16] 0.0, 128
    %963 = vxpose.xlu0.b32.cont [7/16] 0.0, 128
    %964 = vxpose.xlu0.b32.cont [8/16] 0.0, 128
    %965 = vxpose.xlu0.b32.cont [9/16] 0.0, 128
    %966 = vxpose.xlu0.b32.cont [10/16] 0.0, 128
    %967 = vxpose.xlu0.b32.cont [11/16] 0.0, 128
    %968 = vxpose.xlu0.b32.cont [12/16] 0.0, 128
    %969 = vxpose.xlu0.b32.cont [13/16] 0.0, 128
    %970 = vxpose.xlu0.b32.cont [14/16] 0.0, 128
    %971 = vxpose.xlu0.b32.cont [15/16] 0.0, 128
    %972 = vxpose.xlu0.b32.end [16/16] 0.0, 128
    %v973 = vpop.trf.xlu0
    %v974 = vpop.trf.xlu0
    %v975 = vpop.trf.xlu0
    %v976 = vpop.trf.xlu0
    %v977 = vpop.trf.xlu0
    %v978 = vpop.trf.xlu0
    %v979 = vpop.trf.xlu0
    %v980 = vpop.trf.xlu0
    %v981 = vpop.trf.xlu0
    %v982 = vpop.trf.xlu0
    %v983 = vpop.trf.xlu0
    %v984 = vpop.trf.xlu0
    %v985 = vpop.trf.xlu0
    %v986 = vpop.trf.xlu0
    %v987 = vpop.trf.xlu0
    %v988 = vpop.trf.xlu0
    %989 = vxpose.xlu0.b32.start [1/16] %v891, 128
    %990 = vxpose.xlu0.b32.cont [2/16] %v892, 128
    %991 = vxpose.xlu0.b32.cont [3/16] 0.0, 128
    %992 = vxpose.xlu0.b32.cont [4/16] 0.0, 128
    %993 = vxpose.xlu0.b32.cont [5/16] 0.0, 128
    %994 = vxpose.xlu0.b32.cont [6/16] 0.0, 128
    %995 = vxpose.xlu0.b32.cont [7/16] 0.0, 128
    %996 = vxpose.xlu0.b32.cont [8/16] 0.0, 128
    %997 = vxpose.xlu0.b32.cont [9/16] 0.0, 128
    %998 = vxpose.xlu0.b32.cont [10/16] 0.0, 128
    %999 = vxpose.xlu0.b32.cont [11/16] 0.0, 128
    %1000 = vxpose.xlu0.b32.cont [12/16] 0.0, 128
    %1001 = vxpose.xlu0.b32.cont [13/16] 0.0, 128
    %1002 = vxpose.xlu0.b32.cont [14/16] 0.0, 128
    %1003 = vxpose.xlu0.b32.cont [15/16] 0.0, 128
    %1004 = vxpose.xlu0.b32.end [16/16] 0.0, 128
    %v1005 = vpop.trf.xlu0
    %v1006 = vpop.trf.xlu0
    %v1007 = vpop.trf.xlu0
    %v1008 = vpop.trf.xlu0
    %v1009 = vpop.trf.xlu0
    %v1010 = vpop.trf.xlu0
    %v1011 = vpop.trf.xlu0
    %v1012 = vpop.trf.xlu0
    %v1013 = vpop.trf.xlu0
    %v1014 = vpop.trf.xlu0
    %v1015 = vpop.trf.xlu0
    %v1016 = vpop.trf.xlu0
    %v1017 = vpop.trf.xlu0
    %v1018 = vpop.trf.xlu0
    %v1019 = vpop.trf.xlu0
    %v1020 = vpop.trf.xlu0
    %v1021 = vadd.f32 %v885, %v909
    %v1022 = vadd.f32 %v886, %v910
    %v1023 = vadd.f32 %v887, %v941
    %v1024 = vadd.f32 %v888, %v942
    %v1025 = vadd.f32 %v889, %v973
    %v1026 = vadd.f32 %v890, %v974
    %v1027 = vadd.f32 %v891, %v1005
    %v1028 = vadd.f32 %v892, %v1006
    %v1029 = vmul.f32 %v1021, 0.5
    %v1030 = vmul.f32 %v1022, 0.5
    %v1031 = vmul.f32 %v1023, 0.5
    %v1032 = vmul.f32 %v1024, 0.5
    %v1033 = vmul.f32 %v1025, 0.5
    %v1034 = vmul.f32 %v1026, 0.5
    %v1035 = vmul.f32 %v1027, 0.5
    %v1036 = vmul.f32 %v1028, 0.5
    %1037 = vst.msk [vmem:[%s4] sm:$0xff] %vm105, %v1029
    %1038 = vst.msk [vmem:[%s4 + $0x8] sm:$0xff] %vm105, %v1030
    %1039 = vst.msk [vmem:[%s4 + $0x10] sm:$0xff] %vm105, %v1031
    %1040 = vst.msk [vmem:[%s4 + $0x18] sm:$0xff] %vm105, %v1032
    %1041 = vst.msk [vmem:[%s4 + $0x20] sm:$0xff] %vm105, %v1033
    %1042 = vst.msk [vmem:[%s4 + $0x28] sm:$0xff] %vm105, %v1034
    %1043 = vst.msk [vmem:[%s4 + $0x30] sm:$0xff] %vm105, %v1035
    %1044 = vst.msk [vmem:[%s4 + $0x38] sm:$0xff] %vm105, %v1036
    // Predicated region
    $region22: #{ising_forward.1} parent=1 // pred_check
      _
    $region23: #{ising_forward.1} parent=1 // pred_check_branch
      %1046 = sbr.rel (0) target = $region25
    $region24: #{ising_forward.1} parent=1 // pred_region
      _
    $region25: #{ising_forward.1} parent=1 // pred_fallthru
      _
    // Predicated region
    $region26: #{ising_forward.1} parent=1 // pred_check
      _
    $region27: #{ising_forward.1} parent=1 // pred_check_branch
      %1048 = sbr.rel (0) target = $region29
    $region28: #{ising_forward.1} parent=1 // pred_region
      _
    $region29: #{ising_forward.1} parent=1 // pred_fallthru
      _
    // Predicated region
    $region30: #{ising_forward.1} parent=1 // pred_check
      _
    $region31: #{ising_forward.1} parent=1 // pred_check_branch
      %1050 = sbr.rel (0) target = $region33
    $region32: #{ising_forward.1} parent=1 // pred_region
      _
    $region33: #{ising_forward.1} parent=1 // pred_fallthru
      _
    // Predicated region
    $region34: #{ising_forward.1} parent=1 // pred_check
      _
    $region35: #{ising_forward.1} parent=1 // pred_check_branch
      %1052 = sbr.rel (0) target = $region37
    $region36: #{ising_forward.1} parent=1 // pred_region
      _
    $region37: #{ising_forward.1} parent=1 // pred_fallthru
      _
    %1053 = vsyncpa [#allocation3], 1
    %1054 = vsyncpa [#allocation5], 1

</llo_original>
